<compile_context>
chip_gen: v7x
topology: tpu7x:2x2x1
jax: 0.10.0
libtpu: 0.0.40
codegen_flags: <defaults>
</compile_context>

<pallas_src>
import jax
import jax.numpy as jnp
from jax import lax
from jax.experimental import pallas as pl
from jax.experimental.pallas import tpu as pltpu

TEMPERATURE = 0.5
BASE_TEMPERATURE = 0.07          # unused by the reference forward math (kept for parity)
SCALE_BY_TEMPERATURE = True


def _supcon_kernel(x_ref, dev_row_ref, dev_col_ref, out_ref):
    x = x_ref[...].astype(jnp.float32)                                    # (B, D)
    B = x.shape[0]

    # F.normalize(x, p=2, dim=1): x / max(||x||, 1e-12)  ==  x * rsqrt(max(||x||^2, 1e-24))
    sq = jnp.sum(x * x, axis=1, keepdims=True)                            # (B, 1)
    xn = x * lax.rsqrt(jnp.maximum(sq, 1e-24))                            # EUP rsqrt, no VALU divide

    # |dev_i - dev_j| from the two pre-clipped broadcastable views.
    dev_row = dev_row_ref[...].astype(jnp.float32)                        # (1, B)
    dev_col = dev_col_ref[...].astype(jnp.float32)                        # (B, 1)
    dev_b = jnp.abs(dev_row - dev_col)                                    # (B, B)

    # anchor_dot_contrast = (xn @ xn.T) / temperature   (MXU)
    adc = lax.dot_general(
        xn, xn, (((1,), (1,)), ((), ())),
        preferred_element_type=jnp.float32) * (1.0 / TEMPERATURE)         # (B, B)

    logits_max = jnp.max(adc, axis=1, keepdims=True)
    logits = adc - logits_max
    exp_logits = jnp.exp(logits)

    # Boolean masks (no separate f32 mask/eye/logits_mask/pos/neg temporaries).
    row_i = lax.broadcasted_iota(jnp.int32, (B, B), 0)
    col_i = lax.broadcasted_iota(jnp.int32, (B, B), 1)
    off_diag = row_i != col_i                                             # == (1 - eye)
    pos_bool = jnp.logical_and(dev_b <= 1.0, off_diag)                    # mask * logits_mask

    # Since mask's diagonal is always 1 (|dev_i - dev_i| = 0 <= 1):
    #   positives_mask + negatives_mask == 1 - eye
    # so the reference's two-term denominator collapses to one masked reduce.
    denom = jnp.sum(jnp.where(off_diag, exp_logits, 0.0),
                    axis=1, keepdims=True)                                # (B, 1)

    # sim_coeff = 1 / (1 + dev_b)   (EUP reciprocal, exact)
    sim_coeff = pl.reciprocal(1.0 + dev_b, approx=False)                  # (B, B)

    log_probs = (logits - jnp.log(denom + 1e-6)) * sim_coeff
    # TODO(synk): reference raises ValueError on NaN in log_probs; no in-kernel exception path.

    num_pos = jnp.sum(pos_bool.astype(jnp.float32), axis=1, keepdims=True)  # (B, 1)
    row_sum = jnp.sum(jnp.where(pos_bool, log_probs, 0.0),
                      axis=1, keepdims=True)                              # (B, 1)

    valid = num_pos > 0.0
    per_row = jnp.where(valid, row_sum / jnp.where(valid, num_pos, 1.0), 0.0)
    loss_rows = -per_row
    if SCALE_BY_TEMPERATURE:
        loss_rows = loss_rows * TEMPERATURE

    count = jnp.sum(valid.astype(jnp.float32), keepdims=True)             # (1, 1)
    total = jnp.sum(loss_rows, keepdims=True)                             # (1, 1)
    # Note: if no row has any off-diagonal positive, count == 0 and this returns
    # NaN, matching torch's mean over an empty selection.
    out_ref[...] = total / count


def supcon_loss(x, dev_score):
    """x: (B, D) float, dev_score: (B,) float -> scalar loss."""
    B, D = x.shape
    dev = jnp.clip(dev_score.astype(jnp.float32), -5.0, 5.0)              # clip once, host-side graph
    dev_row = dev.reshape(1, B)
    dev_col = dev.reshape(B, 1)
    out = pl.pallas_call(
        _supcon_kernel,
        out_shape=jax.ShapeDtypeStruct((1, 1), jnp.float32),
        in_specs=[pl.BlockSpec(memory_space=pltpu.MemorySpace.VMEM)] * 3,
        out_specs=pl.BlockSpec(memory_space=pltpu.MemorySpace.VMEM),
        compiler_params=pltpu.CompilerParams(vmem_limit_bytes=64 << 20),
    )(x.astype(jnp.float32), dev_row, dev_col)
    return out[0, 0]


def _supcon_ref(x, dev_score):
    """Pure-JAX reference mirroring the PyTorch forward, for a sanity check."""
    x = x.astype(jnp.float32)
    xn = x / jnp.maximum(jnp.linalg.norm(x, axis=1, keepdims=True), 1e-12)
    dev = jnp.clip(dev_score.astype(jnp.float32), -5.0, 5.0).reshape(1, -1)
    dev_b = jnp.abs(dev - dev.T)
    mask = (dev_b <= 1.0).astype(jnp.float32)
    B = x.shape[0]
    adc = (xn @ xn.T) / TEMPERATURE
    logits = adc - jnp.max(adc, axis=1, keepdims=True)
    exp_logits = jnp.exp(logits)
    logits_mask = 1.0 - jnp.eye(B, dtype=jnp.float32)
    pos = mask * logits_mask
    neg = 1.0 - mask
    sim = 1.0 / (1.0 + dev_b)
    npos = jnp.sum(pos, axis=1)
    denom = (jnp.sum(exp_logits * neg, axis=1, keepdims=True)
             + jnp.sum(exp_logits * pos, axis=1, keepdims=True))
    lp = (logits - jnp.log(denom + 1e-6)) * sim
    row = jnp.sum(lp * pos, axis=1)
    valid = npos > 0
    per = jnp.where(valid, row / jnp.where(valid, npos, 1.0), 0.0)
    loss = -per
    if SCALE_BY_TEMPERATURE:
        loss = loss * TEMPERATURE
    return jnp.sum(jnp.where(valid, loss, 0.0)) / jnp.sum(valid.astype(jnp.float32))


if __name__ == "__main__":
    key = jax.random.PRNGKey(0)
    kx, kd = jax.random.split(key)
    B, D = 8, 32
    x = jax.random.normal(kx, (B, D), dtype=jnp.float32)
    dev_score = jax.random.normal(kd, (B,), dtype=jnp.float32) * 3.0  # some pairs within |diff|<=1, some not

    loss = supcon_loss(x, dev_score)
    loss = jax.block_until_ready(loss)

    ref = _supcon_ref(x, dev_score)
    assert jnp.isfinite(loss), "kernel produced non-finite loss"
    assert jnp.allclose(loss, ref, rtol=1e-5, atol=1e-5), (loss, ref)

    print("KERNEL_OK")
</pallas_src>

<mosaic_0001>
module attributes {stable_mosaic.version = 11 : i64} {
  func.func @_supcon_kernel(%arg0: memref<8x32xf32, #tpu.memory_space<vmem>>, %arg1: memref<1x8xf32, #tpu.memory_space<vmem>>, %arg2: memref<8x1xf32, #tpu.memory_space<vmem>>, %arg3: memref<1x1xf32, #tpu.memory_space<vmem>>) attributes {dimension_semantics = [], scalar_prefetch = 0 : i64, scratch_operands = 0 : i64, tpu.core_type = #tpu.core_type<tc>} {
    %c0 = arith.constant 0 : index
    %c0_0 = arith.constant 0 : index
    %0 = vector.load %arg0[%c0, %c0_0] : memref<8x32xf32, #tpu.memory_space<vmem>>, vector<8x32xf32>
    %1 = arith.mulf %0, %0 : vector<8x32xf32>
    %cst = arith.constant dense<0.000000e+00> : vector<8xf32>
    %2 = vector.multi_reduction <add>, %1, %cst [1] : vector<8x32xf32> to vector<8xf32>
    %3 = vector.shape_cast %2 : vector<8xf32> to vector<8x1xf32>
    %cst_1 = arith.constant 1.000000e-24 : f32
    %4 = vector.broadcast %cst_1 : f32 to vector<8x1xf32>
    %5 = arith.maximumf %3, %4 : vector<8x1xf32>
    %6 = math.rsqrt %5 : vector<8x1xf32>
    %7 = vector.broadcast %6 : vector<8x1xf32> to vector<8x32xf32>
    %8 = arith.mulf %0, %7 : vector<8x32xf32>
    %c0_2 = arith.constant 0 : index
    %c0_3 = arith.constant 0 : index
    %9 = vector.load %arg1[%c0_2, %c0_3] : memref<1x8xf32, #tpu.memory_space<vmem>>, vector<1x8xf32>
    %c0_4 = arith.constant 0 : index
    %c0_5 = arith.constant 0 : index
    %10 = vector.load %arg2[%c0_4, %c0_5] : memref<8x1xf32, #tpu.memory_space<vmem>>, vector<8x1xf32>
    %11 = vector.broadcast %9 : vector<1x8xf32> to vector<8x8xf32>
    %12 = vector.broadcast %10 : vector<8x1xf32> to vector<8x8xf32>
    %13 = arith.subf %11, %12 : vector<8x8xf32>
    %14 = math.absf %13 : vector<8x8xf32>
    %cst_6 = arith.constant dense<0.000000e+00> : vector<8x8xf32>
    %15 = tpu.matmul %8, %8, %cst_6 {dimension_numbers = #tpu.dot_dimension_numbers<[1], [1], [0], [0], [0, 0, 1, 0], [], []>} : vector<8x32xf32>, vector<8x32xf32>, vector<8x8xf32> -> vector<8x8xf32>
    %cst_7 = arith.constant 2.000000e+00 : f32
    %16 = vector.broadcast %cst_7 : f32 to vector<8x8xf32>
    %17 = arith.mulf %15, %16 : vector<8x8xf32>
    %cst_8 = arith.constant dense<0xFF800000> : vector<8xf32>
    %18 = vector.multi_reduction <maximumf>, %17, %cst_8 [1] : vector<8x8xf32> to vector<8xf32>
    %19 = vector.shape_cast %18 : vector<8xf32> to vector<8x1xf32>
    %20 = vector.broadcast %19 : vector<8x1xf32> to vector<8x8xf32>
    %21 = arith.subf %17, %20 : vector<8x8xf32>
    %22 = math.exp %21 : vector<8x8xf32>
    %23 = tpu.iota {dimensions = array<i32: 0>} : vector<8x8xi32>
    %24 = tpu.iota {dimensions = array<i32: 1>} : vector<8x8xi32>
    %25 = arith.cmpi ne, %23, %24 : vector<8x8xi32>
    %cst_9 = arith.constant 1.000000e+00 : f32
    %26 = vector.broadcast %cst_9 : f32 to vector<8x8xf32>
    %27 = arith.cmpf ole, %14, %26 : vector<8x8xf32>
    %28 = arith.andi %27, %25 : vector<8x8xi1>
    %cst_10 = arith.constant 0.000000e+00 : f32
    %29 = vector.broadcast %cst_10 : f32 to vector<8x8xf32>
    %30 = arith.select %25, %22, %29 : vector<8x8xi1>, vector<8x8xf32>
    %cst_11 = arith.constant dense<0.000000e+00> : vector<8xf32>
    %31 = vector.multi_reduction <add>, %30, %cst_11 [1] : vector<8x8xf32> to vector<8xf32>
    %32 = vector.shape_cast %31 : vector<8xf32> to vector<8x1xf32>
    %cst_12 = arith.constant 1.000000e+00 : f32
    %33 = vector.broadcast %cst_12 : f32 to vector<8x8xf32>
    %34 = arith.addf %33, %14 : vector<8x8xf32>
    %35 = tpu.reciprocal %34 : vector<8x8xf32> -> vector<8x8xf32>
    %cst_13 = arith.constant 9.99999997E-7 : f32
    %36 = vector.broadcast %cst_13 : f32 to vector<8x1xf32>
    %37 = arith.addf %32, %36 : vector<8x1xf32>
    %38 = math.log %37 : vector<8x1xf32>
    %39 = vector.broadcast %38 : vector<8x1xf32> to vector<8x8xf32>
    %40 = arith.subf %21, %39 : vector<8x8xf32>
    %41 = arith.mulf %40, %35 : vector<8x8xf32>
    %42 = arith.extui %28 : vector<8x8xi1> to vector<8x8xi32>
    %43 = arith.sitofp %42 : vector<8x8xi32> to vector<8x8xf32>
    %cst_14 = arith.constant dense<0.000000e+00> : vector<8xf32>
    %44 = vector.multi_reduction <add>, %43, %cst_14 [1] : vector<8x8xf32> to vector<8xf32>
    %45 = vector.shape_cast %44 : vector<8xf32> to vector<8x1xf32>
    %cst_15 = arith.constant 0.000000e+00 : f32
    %46 = vector.broadcast %cst_15 : f32 to vector<8x8xf32>
    %47 = arith.select %28, %41, %46 : vector<8x8xi1>, vector<8x8xf32>
    %cst_16 = arith.constant dense<0.000000e+00> : vector<8xf32>
    %48 = vector.multi_reduction <add>, %47, %cst_16 [1] : vector<8x8xf32> to vector<8xf32>
    %49 = vector.shape_cast %48 : vector<8xf32> to vector<8x1xf32>
    %cst_17 = arith.constant 0.000000e+00 : f32
    %50 = vector.broadcast %cst_17 : f32 to vector<8x1xf32>
    %51 = arith.cmpf ogt, %45, %50 : vector<8x1xf32>
    %cst_18 = arith.constant 1.000000e+00 : f32
    %52 = vector.broadcast %cst_18 : f32 to vector<8x1xf32>
    %53 = arith.select %51, %45, %52 : vector<8x1xi1>, vector<8x1xf32>
    %54 = arith.divf %49, %53 : vector<8x1xf32>
    %cst_19 = arith.constant 0.000000e+00 : f32
    %55 = vector.broadcast %cst_19 : f32 to vector<8x1xf32>
    %56 = arith.select %51, %54, %55 : vector<8x1xi1>, vector<8x1xf32>
    %cst_20 = arith.constant 0.000000e+00 : f32
    %57 = vector.broadcast %cst_20 : f32 to vector<8x1xf32>
    %58 = arith.subf %57, %56 : vector<8x1xf32>
    %cst_21 = arith.constant 5.000000e-01 : f32
    %59 = vector.broadcast %cst_21 : f32 to vector<8x1xf32>
    %60 = arith.mulf %58, %59 : vector<8x1xf32>
    %61 = arith.extui %51 : vector<8x1xi1> to vector<8x1xi32>
    %62 = arith.sitofp %61 : vector<8x1xi32> to vector<8x1xf32>
    %63 = vector.shape_cast %62 : vector<8x1xf32> to vector<1x8x1xf32>
    %cst_22 = arith.constant dense<0.000000e+00> : vector<1xf32>
    %64 = vector.multi_reduction <add>, %63, %cst_22 [1, 2] : vector<1x8x1xf32> to vector<1xf32>
    %65 = vector.shape_cast %64 : vector<1xf32> to vector<1x1x1xf32>
    %66 = vector.extract %65[0, 0, 0] : f32 from vector<1x1x1xf32>
    %67 = vector.broadcast %66 : f32 to vector<1x1xf32>
    %68 = vector.shape_cast %60 : vector<8x1xf32> to vector<1x8x1xf32>
    %cst_23 = arith.constant dense<0.000000e+00> : vector<1xf32>
    %69 = vector.multi_reduction <add>, %68, %cst_23 [1, 2] : vector<1x8x1xf32> to vector<1xf32>
    %70 = vector.shape_cast %69 : vector<1xf32> to vector<1x1x1xf32>
    %71 = vector.extract %70[0, 0, 0] : f32 from vector<1x1x1xf32>
    %72 = vector.broadcast %71 : f32 to vector<1x1xf32>
    %73 = arith.divf %72, %67 : vector<1x1xf32>
    %c0_24 = arith.constant 0 : index
    %c0_25 = arith.constant 0 : index
    %74 = vector.load %arg3[%c0_24, %c0_25] : memref<1x1xf32, #tpu.memory_space<vmem>>, vector<1x1xf32>
    tpu.vector_store %arg3[%c0_24, %c0_25], %73 {strides = array<i32>} : memref<1x1xf32, #tpu.memory_space<vmem>>, vector<1x1xf32>,
    return
  }
}

</mosaic_0001>

<llo_original>
// kernel: tpu_custom_call.1
$region0: #{tpu_custom_call.1}
  #allocation0 [shape = 'u32[]', space=smem, size = 0x4, offset = 0x4, fixed_abs, tag = 'smem constant byte address 0x4 - core index']
  #allocation1 [shape = 'u32[144,128]{1,0:T(1,128)}', space=vmem, size = 0x12000, scoped, tag = 'internal scratch']
  %s0 = inlined_call_operand.hbm [shape: f32[8,32], index: 0, kind: input, shape index: {}]
  %s1 = inlined_call_operand.hbm [shape: f32[1,8], index: 1, kind: input, shape index: {}]
  %s2 = inlined_call_operand.hbm [shape: f32[8,1], index: 2, kind: input, shape index: {}]
  %s3 = inlined_call_operand.hbm [shape: f32[1,1], index: 3, kind: output, shape index: {}]
  %s4 = sld [smem:[#allocation0]]
  $region34: #{tpu_custom_call.1} parent=0
    _
  %s6 = ssub.s32 1, %s4
  %s7 = scalar_select 0, %s6, %s4
  $region1: #{tpu_custom_call.1} parent=0
    #allocation2 [shape = 'u8[4096]{0}', space=vmem, size = 0x1000, scoped, tag = 'input window, operand 0, single buffered']
    #allocation3 [shape = 's32[1]{0}', space=sflag, size = 0x4, scoped, tag = 'scoped memory for tpu_custom_call.1']
    #allocation4 [shape = 's32[1]{0}', space=sflag, size = 0x4, scoped, tag = 'scoped memory for tpu_custom_call.1']
    #allocation5 [shape = 'u8[512]{0}', space=vmem, size = 0x400, scoped, tag = 'input window, operand 1, single buffered']
    #allocation6 [shape = 's32[1]{0}', space=sflag, size = 0x4, scoped, tag = 'scoped memory for tpu_custom_call.1']
    #allocation7 [shape = 'u8[4096]{0}', space=vmem, size = 0x1000, scoped, tag = 'input window, operand 2, single buffered']
    #allocation8 [shape = 'u8[512]{0}', space=vmem, size = 0x400, scoped, tag = 'output window, operand 0, single buffered']
    %8 = vsyncpa [#allocation3], 0
    %9 = vsyncpa [#allocation6], 0
    %10 = vsyncpa [#allocation4], 0
    // Predicated region
    $region2: #{tpu_custom_call.1} parent=1 // pred_check
      _
    $region3: #{tpu_custom_call.1} parent=1 // pred_check_branch
      %12 = sbr.rel (0) target = $region5
    $region4: #{tpu_custom_call.1} parent=1 // pred_region
      %s14 = ssub.s32 128, 128
      %15 = vsyncadd [#allocation3], %s14
      %s17 = sshll.u32 [#allocation2], 4
      %s18 = int_to_ptr.vmem [resolvable:$true] %s17
      %20 = dma.hbm_to_vmem [thread:$0]  %s0, 128, %s18, [#allocation3]
    $region5: #{tpu_custom_call.1} parent=1 // pred_fallthru
      _
    // Predicated region
    $region6: #{tpu_custom_call.1} parent=1 // pred_check
      _
    $region7: #{tpu_custom_call.1} parent=1 // pred_check_branch
      %22 = sbr.rel (0) target = $region9
    $region8: #{tpu_custom_call.1} parent=1 // pred_region
      %s24 = ssub.s32 16, 16
      %25 = vsyncadd [#allocation6], %s24
      %s27 = sshll.u32 [#allocation5], 4
      %s28 = int_to_ptr.vmem [resolvable:$true] %s27
      %30 = dma.hbm_to_vmem [thread:$0]  %s1, 16, %s28, [#allocation6]
    $region9: #{tpu_custom_call.1} parent=1 // pred_fallthru
      _
    // Predicated region
    $region10: #{tpu_custom_call.1} parent=1 // pred_check
      _
    $region11: #{tpu_custom_call.1} parent=1 // pred_check_branch
      %32 = sbr.rel (0) target = $region13
    $region12: #{tpu_custom_call.1} parent=1 // pred_region
      %s34 = ssub.s32 128, 128
      %35 = vsyncadd [#allocation6], %s34
      %s37 = sshll.u32 [#allocation7], 4
      %s38 = int_to_ptr.vmem [resolvable:$true] %s37
      %40 = dma.hbm_to_vmem [thread:$0]  %s2, 128, %s38, [#allocation6]
    $region13: #{tpu_custom_call.1} parent=1 // pred_fallthru
      _
    // Predicated region
    $region14: #{tpu_custom_call.1} parent=1 // pred_check
      _
    $region15: #{tpu_custom_call.1} parent=1 // pred_check_branch
      %42 = sbr.rel (0) target = $region17
    $region16: #{tpu_custom_call.1} parent=1 // pred_region
      %43 = dma.done [#allocation3], 128
    $region17: #{tpu_custom_call.1} parent=1 // pred_fallthru
      _
    // Predicated region
    $region18: #{tpu_custom_call.1} parent=1 // pred_check
      _
    $region19: #{tpu_custom_call.1} parent=1 // pred_check_branch
      %45 = sbr.rel (0) target = $region21
    $region20: #{tpu_custom_call.1} parent=1 // pred_region
      %46 = dma.done [#allocation6], 16
    $region21: #{tpu_custom_call.1} parent=1 // pred_fallthru
      _
    // Predicated region
    $region22: #{tpu_custom_call.1} parent=1 // pred_check
      _
    $region23: #{tpu_custom_call.1} parent=1 // pred_check_branch
      %48 = sbr.rel (0) target = $region25
    $region24: #{tpu_custom_call.1} parent=1 // pred_region
      %49 = dma.done [#allocation6], 128
    $region25: #{tpu_custom_call.1} parent=1 // pred_fallthru
      _
    %v50 = vld [vmem:[#allocation2] sm:$0xff]
    %v51 = vmul.f32 %v50, %v50
    %vm52 = vcmask 261120
    %v53 = vsel %vm52, %v51, 0.0
    %54 = vadd.xlane.f32.xlu0 %v53
    %v55 = vpop.xlane.xlu0 %54
    %v56 = vmax.f32 %v55, 1e-24
    %v57 = vrsqrt.pop %v56
    %v58 = vmul.f32 %v50, %v57
    %v59 = vld [vmem:[#allocation5] sm:$0x1]
    %v60 = vld [vmem:[#allocation7] sm:$0xff]
    %v62 = vlaneseq
    %v63 = vshrl.u32 %v62, 7
    %v64 = vsub.s32 0, %v63
    %v65 = vrot.slane %v59, %v64
    %68 = vset.pattern.permute.xlu0 0
    %69 = vperm.xlu0 %68, %v60
    %v70 = vpop.permute.xlu0 %69
    %v72 = vsub.f32 %v65, %v70
    %v73 = vand.u32 2147483647, %v72
    %v75 = vsel %vm52, %v58, 0
    %77 = vmatprep.subr.mxu0 0.0
    %78 = vmatpush1.xpose.msra.mxu0 %v75
    %79 = vmatprep.subr.mxu0 0.0
    %80 = vmatpush1.xpose.msra.mxu0 0.0
    %81 = vmatprep.subr.mxu0 0.0
    %82 = vmatpush1.xpose.msra.mxu0 0.0
    %83 = vmatprep.subr.mxu0 0.0
    %84 = vmatpush1.xpose.msra.mxu0 0.0
    %85 = vmatprep.subr.mxu0 0.0
    %86 = vmatpush1.xpose.msra.mxu0 0.0
    %87 = vmatprep.subr.mxu0 0.0
    %88 = vmatpush1.xpose.msra.mxu0 0.0
    %89 = vmatprep.subr.mxu0 0.0
    %90 = vmatpush1.xpose.msra.mxu0 0.0
    %91 = vmatprep.subr.mxu0 0.0
    %92 = vmatpush1.xpose.msra.mxu0 0.0
    %93 = vmatprep.subr.mxu0 0.0
    %94 = vmatpush1.xpose.msra.mxu0 0.0
    %95 = vmatprep.subr.mxu0 0.0
    %96 = vmatpush1.xpose.msra.mxu0 0.0
    %97 = vmatprep.subr.mxu0 0.0
    %98 = vmatpush1.xpose.msra.mxu0 0.0
    %99 = vmatprep.subr.mxu0 0.0
    %100 = vmatpush1.xpose.msra.mxu0 0.0
    %101 = vmatprep.subr.mxu0 0.0
    %102 = vmatpush1.xpose.msra.mxu0 0.0
    %103 = vmatprep.subr.mxu0 0.0
    %104 = vmatpush1.xpose.msra.mxu0 0.0
    %105 = vmatprep.subr.mxu0 0.0
    %106 = vmatpush1.xpose.msra.mxu0 0.0
    %107 = vmatprep.subr.mxu0 0.0
    %108 = vmatpush1.xpose.msra.mxu0 0.0
    %109 = vmatprep.subr.mxu0 0.0
    %110 = vmatpush1.xpose.msra.mxu0 0.0
    %111 = vmatprep.subr.mxu0 0.0
    %112 = vmatpush1.xpose.msra.mxu0 0.0
    %113 = vmatprep.subr.mxu0 0.0
    %114 = vmatpush1.xpose.msra.mxu0 0.0
    %115 = vmatprep.subr.mxu0 0.0
    %116 = vmatpush1.xpose.msra.mxu0 0.0
    %117 = vmatprep.subr.mxu0 0.0
    %118 = vmatpush1.xpose.msra.mxu0 0.0
    %119 = vmatprep.subr.mxu0 0.0
    %120 = vmatpush1.xpose.msra.mxu0 0.0
    %121 = vmatprep.subr.mxu0 0.0
    %122 = vmatpush1.xpose.msra.mxu0 0.0
    %123 = vmatprep.subr.mxu0 0.0
    %124 = vmatpush1.xpose.msra.mxu0 0.0
    %125 = vmatprep.subr.mxu0 0.0
    %126 = vmatpush1.xpose.msra.mxu0 0.0
    %127 = vmatprep.subr.mxu0 0.0
    %128 = vmatpush1.xpose.msra.mxu0 0.0
    %129 = vmatprep.subr.mxu0 0.0
    %130 = vmatpush1.xpose.msra.mxu0 0.0
    %131 = vmatprep.subr.mxu0 0.0
    %132 = vmatpush1.xpose.msra.mxu0 0.0
    %133 = vmatprep.subr.mxu0 0.0
    %134 = vmatpush1.xpose.msra.mxu0 0.0
    %135 = vmatprep.subr.mxu0 0.0
    %136 = vmatpush1.xpose.msra.mxu0 0.0
    %137 = vmatprep.subr.mxu0 0.0
    %138 = vmatpush1.xpose.msra.mxu0 0.0
    %139 = vmatprep.subr.mxu0 0.0
    %140 = vmatpush1.xpose.msra.mxu0 0.0
    %141 = vmatprep.mubr.f32.mxu0 0.0
    %142 = vmatmul.mubr.f32.gmra.mrb[0].mxu0 %v75
    %v143 = vpop.f32.mrb[0].mxu0
    %v144 = vadd.f32 0.0, %v143
    %v145 = vpop.f32.mrb[0].mxu0
    %146 = vdwg.mxu0
    %v147 = vmul.f32 %v144, 2.0
    %vm148 = vcmask 64512
    %v149 = vsel %vm148, %v147, -inf
    %150 = vmax.xlane.f32.xlu0 %v149
    %v151 = vpop.xlane.xlu0 %150
    %v152 = vsub.f32 %v147, %v151
    %v153 = vmul.f32 %v152, 1.442695
    %v154 = vpow.pop %v153
    %v155 = vlaneseq
    %v156 = vshrl.u32 %v155, 7
    %v157 = vlaneseq
    %v158 = vand.u32 %v157, 127
    %vm159 = vcmp.ne.s32.totalorder %v156, %v158
    %vm160 = vcmp.le.f32.partialorder %v73, 1.0
    %vm161 = vmand %vm160, %vm159
    %v162 = vsel %vm159, %v154, 0.0
    %v163 = vsel %vm148, %v162, 0.0
    %164 = vadd.xlane.f32.xlu0 %v163
    %v165 = vpop.xlane.xlu0 %164
    %v166 = vadd.f32 %v73, 1.0
    %v167 = vrcp.pop %v166
    %v168 = vadd.f32 %v165, 1e-06
    %v169 = vlog2.pop %v168
    %v170 = vmul.f32 %v169, 0.6931472
    %v171 = vsub.f32 %v152, %v170
    %v172 = vmul.f32 %v171, %v167
    %v173 = vsel %vm161, 1, 0
    %v174 = vcvt.s32.f32 %v173
    %v175 = vsel %vm148, %v174, 0.0
    %176 = vadd.xlane.f32.xlu0 %v175
    %v177 = vpop.xlane.xlu0 %176
    %v178 = vsel %vm161, %v172, 0.0
    %v179 = vsel %vm148, %v178, 0.0
    %180 = vadd.xlane.f32.xlu0 %v179
    %v181 = vpop.xlane.xlu0 %180
    %vm182 = vcmp.gt.f32.partialorder %v177, 0.0
    %v183 = vsel %vm182, %v177, 1.0
    %v184 = vrcp.pop %v183
    %v185 = vmul.f32 %v181, %v184
    %v186 = vsel %vm182, %v185, 0.0
    %v187 = vsub.f32 0.0, %v186
    %v188 = vmul.f32 %v187, 0.5
    %v189 = vsel %vm182, 1, 0
    %v190 = vcvt.s32.f32 %v189
    %vm191 = vcmask 7168
    %v192 = vsel %vm191, %v190, 0.0
    %193 = vadd.xlane.f32.xlu0 %v192
    %v194 = vpop.xlane.xlu0 %193
    %v195 = vrot.slane %v194, 4
    %v196 = vadd.f32 %v194, %v195
    %v197 = vrot.slane %v196, 2
    %v198 = vadd.f32 %v196, %v197
    %v199 = vrot.slane %v198, 1
    %v200 = vadd.f32 %v198, %v199
    %s201 = vtos %v200
    %v202 = vstv %s201
    %v203 = vsel %vm191, %v188, 0.0
    %204 = vadd.xlane.f32.xlu0 %v203
    %v205 = vpop.xlane.xlu0 %204
    %v206 = vrot.slane %v205, 4
    %v207 = vadd.f32 %v205, %v206
    %v208 = vrot.slane %v207, 2
    %v209 = vadd.f32 %v207, %v208
    %v210 = vrot.slane %v209, 1
    %v211 = vadd.f32 %v209, %v210
    %s212 = vtos %v211
    %v213 = vstv %s212
    %v214 = vrcp.pop %v202
    %v215 = vmul.f32 %v213, %v214
    %vm216 = vcmask 0
    %217 = vst.msk [vmem:[#allocation8] sm:$0x1] %vm216, %v215
    // Predicated region
    $region26: #{tpu_custom_call.1} parent=1 // pred_check
      _
    $region27: #{tpu_custom_call.1} parent=1 // pred_check_branch
      %219 = sbr.rel (0) target = $region29
    $region28: #{tpu_custom_call.1} parent=1 // pred_region
      %s221 = ssub.s32 16, 16
      %222 = vsyncadd [#allocation4], %s221
      %s224 = sshll.u32 [#allocation8], 4
      %s225 = int_to_ptr.vmem [resolvable:$true] %s224
      %227 = dma.vmem_to_hbm [thread:$0]  %s225, 16, %s3, [#allocation4]
    $region29: #{tpu_custom_call.1} parent=1 // pred_fallthru
      _
    // Predicated region
    $region30: #{tpu_custom_call.1} parent=1 // pred_check
      _
    $region31: #{tpu_custom_call.1} parent=1 // pred_check_branch
      %229 = sbr.rel (0) target = $region33
    $region32: #{tpu_custom_call.1} parent=1 // pred_region
      %230 = dma.done [#allocation4], 16
    $region33: #{tpu_custom_call.1} parent=1 // pred_fallthru
      _
    %231 = vsyncpa [#allocation3], 1
    %232 = vsyncpa [#allocation6], 1
    %233 = vsyncpa [#allocation4], 1

</llo_original>
